<compile_context>
chip_gen: v5e
topology: v5e:2x2
jax: 0.10.0
libtpu: 0.0.40
codegen_flags: <defaults>
</compile_context>

<pallas_src>
import jax
import jax.numpy as jnp
from jax.experimental import pallas as pl
from jax.experimental.pallas import tpu as pltpu

LANE = 128      # vreg lane width
SUBLANE = 8     # f32 sublanes per vreg
HIDDEN = 10     # fc1 output features (logical)


def _round_up(v, m):
    return (v + m - 1) // m * m


# --------------------------------------------------------------------------
# Kernel: fc2(relu(fc1(x))) on one (tile_b, n_states) batch tile.
#   w1_p : [n_states, hid_p]   (hidden padded to 128 lanes)
#   b1_p : [1, hid_p]
#   w2_p : [hid_p, n_actions]  (narrow output — no padded writeback)
#   b2_p : [1, n_actions]
# --------------------------------------------------------------------------
def net_kernel(x_ref, w1_ref, b1_ref, w2_ref, b2_ref, o_ref):
    h = jnp.dot(x_ref[...], w1_ref[...], preferred_element_type=jnp.float32)
    h = jnp.maximum(h + b1_ref[...], 0.0)                 # [tile_b, hid_p] f32
    y = jnp.dot(h, w2_ref[...], preferred_element_type=jnp.float32)
    o_ref[...] = (y + b2_ref[...]).astype(o_ref.dtype)    # [tile_b, n_actions]


# --------------------------------------------------------------------------
# One-time parameter padding (call at init / after each optimizer step,
# NOT inside the per-step forward).
# --------------------------------------------------------------------------
def pad_params(w1, b1, w2, b2):
    """w1: [n_states, hidden], b1: [hidden], w2: [hidden, n_actions], b2: [n_actions]."""
    n_states, hidden = w1.shape
    n_actions = w2.shape[1]
    hid_p = _round_up(max(hidden, LANE), LANE)
    w1_p = jnp.zeros((n_states, hid_p), jnp.float32).at[:, :hidden].set(w1)
    b1_p = jnp.zeros((1, hid_p), jnp.float32).at[:, :hidden].set(b1.reshape(1, -1))
    w2_p = jnp.zeros((hid_p, n_actions), jnp.float32).at[:hidden, :].set(w2)
    b2_p = b2.reshape(1, n_actions).astype(jnp.float32)
    return w1_p, b1_p, w2_p, b2_p


# --------------------------------------------------------------------------
# Forward wrapper.
# --------------------------------------------------------------------------
def net_forward(x, padded_params, *, tile_b=2048, min_pallas_batch=512,
                force_pallas=False):
    """x: [B, n_states] f32;  padded_params = pad_params(...).  Returns [B, n_actions]."""
    w1_p, b1_p, w2_p, b2_p = padded_params
    B, n_states = x.shape
    hid_p = w1_p.shape[1]
    n_actions = w2_p.shape[1]

    # Small-batch fast path: launch/step overhead dominates for the DQN act
    # path (B=1..2) and typical train batches; plain jnp wins there.
    if B < min_pallas_batch and not force_pallas:
        h = jnp.maximum(x @ w1_p + b1_p, 0.0)
        return h @ w2_p + b2_p

    # ---- batch tile selection ------------------------------------------------
    tile_b = _round_up(max(SUBLANE, min(tile_b, _round_up(B, SUBLANE))), SUBLANE)
    # Keep >= 2 grid steps when the batch allows it so both v7x TensorCores
    # get tiles (harmless on v5e/v6e: 1 TC, tiles just get a bit smaller).
    if B > 2 * SUBLANE:
        tile_b = min(tile_b, _round_up(pl.cdiv(B, 2), SUBLANE))
    grid = (pl.cdiv(B, tile_b),)   # ragged last tile handled by Pallas

    const = lambda shape: pl.BlockSpec(shape, lambda i: (0, 0))  # VMEM-resident

    cost = pl.CostEstimate(
        flops=2 * B * (n_states * hid_p + hid_p * n_actions),
        transcendentals=0,
        bytes_accessed=(B * n_states * 4                               # x
                        + (n_states * hid_p + hid_p * n_actions) * 4   # weights
                        + (hid_p + n_actions) * 4                      # biases
                        + B * n_actions * 4),                          # out (un-padded)
    )

    return pl.pallas_call(
        net_kernel,
        out_shape=jax.ShapeDtypeStruct((B, n_actions), jnp.float32),
        grid=grid,
        in_specs=[
            pl.BlockSpec((tile_b, n_states), lambda i: (i, 0)),  # x: batch-tiled
            const((n_states, hid_p)),                            # w1
            const((1, hid_p)),                                   # b1
            const((hid_p, n_actions)),                           # w2 (narrow)
            const((1, n_actions)),                               # b2 (narrow)
        ],
        # Last dim equals the full array dim (n_actions) -> legal narrow block;
        # HBM-side DMA stays contiguous (full rows), only a masked vst in-kernel.
        out_specs=pl.BlockSpec((tile_b, n_actions), lambda i: (i, 0)),
        compiler_params=pltpu.CompilerParams(
            dimension_semantics=("parallel",),   # shard batch tiles across TCs (v7x)
        ),
        cost_estimate=cost,
    )(x, w1_p, b1_p, w2_p, b2_p)


# --------------------------------------------------------------------------
# Parameter init matching the PyTorch module.
# --------------------------------------------------------------------------
def init_params(key, n_states, n_actions, hidden=HIDDEN):
    k1, k2, k3, k4 = jax.random.split(key, 4)
    # PyTorch: weight.data.normal_(0, 0.1); biases keep default Linear init
    # (uniform(-1/sqrt(fan_in), 1/sqrt(fan_in))).  Weights stored [in, out]
    # so forward is x @ w + b (== x @ weight.T + bias in PyTorch).
    w1 = 0.1 * jax.random.normal(k1, (n_states, hidden), dtype=jnp.float32)
    w2 = 0.1 * jax.random.normal(k2, (hidden, n_actions), dtype=jnp.float32)
    bound1 = n_states ** -0.5
    bound2 = hidden ** -0.5
    b1 = jax.random.uniform(k3, (hidden,), jnp.float32, -bound1, bound1)
    b2 = jax.random.uniform(k4, (n_actions,), jnp.float32, -bound2, bound2)
    return w1, b1, w2, b2


if __name__ == "__main__":
    key = jax.random.PRNGKey(0)
    kx, kp, kb = jax.random.split(key, 3)

    n_states, n_actions = 4, 3
    w1, b1, w2, b2 = init_params(kp, n_states, n_actions)
    padded = pad_params(w1, b1, w2, b2)          # once per parameter update

    def ref_fn(xx):
        return jnp.maximum(xx @ w1 + b1, 0.0) @ w2 + b2

    # --- acting-path shape (tiny batch): jnp fast path ------------------------
    x_small = jax.random.normal(kx, (2, n_states), dtype=jnp.float32)
    out_small = jax.block_until_ready(net_forward(x_small, padded))
    assert out_small.shape == (2, n_actions)
    assert jnp.allclose(out_small, ref_fn(x_small), atol=1e-5, rtol=1e-5)

    # --- same tiny batch forced through the Pallas kernel (ragged tile) -------
    out_small_k = jax.block_until_ready(
        net_forward(x_small, padded, force_pallas=True))
    assert out_small_k.shape == (2, n_actions)
    assert jnp.allclose(out_small_k, ref_fn(x_small), atol=1e-5, rtol=1e-5)

    # --- training-path shape: batched grid, ragged last tile, un-padded out ---
    x_big = jax.random.normal(kb, (1000, n_states), dtype=jnp.float32)
    out_big = jax.block_until_ready(net_forward(x_big, padded, tile_b=256))
    assert out_big.shape == (1000, n_actions)
    assert jnp.allclose(out_big, ref_fn(x_big), atol=1e-5, rtol=1e-5)

    # --- default (large) tile path: >=2 grid steps for v7x's two cores --------
    out_big2 = jax.block_until_ready(net_forward(x_big, padded))
    assert jnp.allclose(out_big2, ref_fn(x_big), atol=1e-5, rtol=1e-5)

    print("KERNEL_OK")
</pallas_src>

<mosaic_0001>
module attributes {stable_mosaic.version = 11 : i64} {
  func.func @net_kernel(%arg0: i32, %arg1: memref<8x4xf32, #tpu.memory_space<vmem>>, %arg2: memref<4x128xf32, #tpu.memory_space<vmem>>, %arg3: memref<1x128xf32, #tpu.memory_space<vmem>>, %arg4: memref<128x3xf32, #tpu.memory_space<vmem>>, %arg5: memref<1x3xf32, #tpu.memory_space<vmem>>, %arg6: memref<8x3xf32, #tpu.memory_space<vmem>>) attributes {dimension_semantics = [#tpu.dimension_semantics<parallel>], iteration_bounds = array<i64: 1>, scalar_prefetch = 0 : i64, scratch_operands = 0 : i64, tpu.core_type = #tpu.core_type<tc>, window_params = [{transform_indices = @transform_0, window_bounds = array<i64: 8, 4>}, {pipeline_mode = #tpu.pipeline_mode<synchronous>, transform_indices = @transform_1, window_bounds = array<i64: 4, 128>}, {pipeline_mode = #tpu.pipeline_mode<synchronous>, transform_indices = @transform_2, window_bounds = array<i64: 1, 128>}, {pipeline_mode = #tpu.pipeline_mode<synchronous>, transform_indices = @transform_3, window_bounds = array<i64: 128, 3>}, {pipeline_mode = #tpu.pipeline_mode<synchronous>, transform_indices = @transform_4, window_bounds = array<i64: 1, 3>}, {transform_indices = @transform_5, window_bounds = array<i64: 8, 3>}]} {
    %c0 = arith.constant 0 : index
    %c0_0 = arith.constant 0 : index
    %0 = vector.load %arg1[%c0, %c0_0] : memref<8x4xf32, #tpu.memory_space<vmem>>, vector<8x4xf32>
    %c0_1 = arith.constant 0 : index
    %c0_2 = arith.constant 0 : index
    %1 = vector.load %arg2[%c0_1, %c0_2] : memref<4x128xf32, #tpu.memory_space<vmem>>, vector<4x128xf32>
    %cst = arith.constant dense<0.000000e+00> : vector<8x128xf32>
    %2 = tpu.matmul %0, %1, %cst {dimension_numbers = #tpu.dot_dimension_numbers<[1], [0], [0], [1], [0, 0, 1, 1], [], []>} : vector<8x4xf32>, vector<4x128xf32>, vector<8x128xf32> -> vector<8x128xf32>
    %c0_3 = arith.constant 0 : index
    %c0_4 = arith.constant 0 : index
    %3 = vector.load %arg3[%c0_3, %c0_4] : memref<1x128xf32, #tpu.memory_space<vmem>>, vector<1x128xf32>
    %4 = vector.broadcast %3 : vector<1x128xf32> to vector<8x128xf32>
    %5 = arith.addf %2, %4 : vector<8x128xf32>
    %cst_5 = arith.constant 0.000000e+00 : f32
    %6 = vector.broadcast %cst_5 : f32 to vector<8x128xf32>
    %7 = arith.maximumf %5, %6 : vector<8x128xf32>
    %c0_6 = arith.constant 0 : index
    %c0_7 = arith.constant 0 : index
    %8 = vector.load %arg4[%c0_6, %c0_7] : memref<128x3xf32, #tpu.memory_space<vmem>>, vector<128x3xf32>
    %cst_8 = arith.constant dense<0.000000e+00> : vector<8x3xf32>
    %9 = tpu.matmul %7, %8, %cst_8 {dimension_numbers = #tpu.dot_dimension_numbers<[1], [0], [0], [1], [0, 0, 1, 1], [], []>} : vector<8x128xf32>, vector<128x3xf32>, vector<8x3xf32> -> vector<8x3xf32>
    %c0_9 = arith.constant 0 : index
    %c0_10 = arith.constant 0 : index
    %10 = vector.load %arg5[%c0_9, %c0_10] : memref<1x3xf32, #tpu.memory_space<vmem>>, vector<1x3xf32>
    %11 = vector.broadcast %10 : vector<1x3xf32> to vector<8x3xf32>
    %12 = arith.addf %9, %11 : vector<8x3xf32>
    %c0_11 = arith.constant 0 : index
    %c0_12 = arith.constant 0 : index
    %13 = vector.load %arg6[%c0_11, %c0_12] : memref<8x3xf32, #tpu.memory_space<vmem>>, vector<8x3xf32>
    tpu.vector_store %arg6[%c0_11, %c0_12], %12 {strides = array<i32>} : memref<8x3xf32, #tpu.memory_space<vmem>>, vector<8x3xf32>,
    return
  }
  func.func @transform_0(%arg0: i32) -> (i32, i32) {
    %c0_i32 = arith.constant 0 : i32
    %c0_i32_0 = arith.constant 0 : i32
    return %arg0, %c0_i32 : i32, i32
  }
  func.func @transform_1(%arg0: i32) -> (i32, i32) {
    %c0_i32 = arith.constant 0 : i32
    %c0_i32_0 = arith.constant 0 : i32
    %c0_i32_1 = arith.constant 0 : i32
    return %c0_i32, %c0_i32_0 : i32, i32
  }
  func.func @transform_2(%arg0: i32) -> (i32, i32) {
    %c0_i32 = arith.constant 0 : i32
    %c0_i32_0 = arith.constant 0 : i32
    %c0_i32_1 = arith.constant 0 : i32
    return %c0_i32, %c0_i32_0 : i32, i32
  }
  func.func @transform_3(%arg0: i32) -> (i32, i32) {
    %c0_i32 = arith.constant 0 : i32
    %c0_i32_0 = arith.constant 0 : i32
    %c0_i32_1 = arith.constant 0 : i32
    return %c0_i32, %c0_i32_0 : i32, i32
  }
  func.func @transform_4(%arg0: i32) -> (i32, i32) {
    %c0_i32 = arith.constant 0 : i32
    %c0_i32_0 = arith.constant 0 : i32
    %c0_i32_1 = arith.constant 0 : i32
    return %c0_i32, %c0_i32_0 : i32, i32
  }
  func.func @transform_5(%arg0: i32) -> (i32, i32) {
    %c0_i32 = arith.constant 0 : i32
    %c0_i32_0 = arith.constant 0 : i32
    return %arg0, %c0_i32 : i32, i32
  }
}

</mosaic_0001>

<llo_original>
// kernel: tpu_custom_call.1
$region0: #{tpu_custom_call.1}
  #allocation0 [shape = 'u32[]', space=smem, size = 0x4, offset = 0x4, fixed_abs, tag = 'smem constant byte address 0x4 - core index']
  #allocation1 [shape = 'u32[72,128]{1,0:T(1,128)}', space=vmem, size = 0x9000, scoped, tag = 'internal scratch']
  %s0 = inlined_call_operand.vmem [shape: f32[2,4], index: 0, kind: input, shape index: {}]
  %s1 = inlined_call_operand.vmem [shape: f32[4,128], index: 1, kind: input, shape index: {}]
  %s2 = inlined_call_operand.vmem [shape: f32[1,128], index: 2, kind: input, shape index: {}]
  %s3 = inlined_call_operand.vmem [shape: f32[128,3], index: 3, kind: input, shape index: {}]
  %s4 = inlined_call_operand.vmem [shape: f32[1,3], index: 4, kind: input, shape index: {}]
  %s5 = inlined_call_operand.hbm [shape: f32[2,3], index: 5, kind: output, shape index: {}]
  %s6 = sld [smem:[#allocation0]]
  $region30: #{tpu_custom_call.1} parent=0
    _
  %s8 = ssub.s32 1, %s6
  %s9 = scalar_select 0, %s8, %s6
  $region1: #{tpu_custom_call.1} parent=0
    #allocation2 [shape = 'u8[4096]{0}', space=vmem, size = 0x1000, scoped, tag = 'output window, operand 0, single buffered']
    #allocation3 [shape = 's32[1]{0}', space=sflag, size = 0x4, scoped, tag = 'scoped memory for tpu_custom_call.1']
    %10 = vsyncpa [#allocation3], 0
    // Predicated region
    $region2: #{tpu_custom_call.1} parent=1 // pred_check
      _
    $region3: #{tpu_custom_call.1} parent=1 // pred_check_branch
      %12 = sbr.rel (0) target = $region5
    $region4: #{tpu_custom_call.1} parent=1 // pred_region
      _
    $region5: #{tpu_custom_call.1} parent=1 // pred_fallthru
      _
    // Predicated region
    $region6: #{tpu_custom_call.1} parent=1 // pred_check
      _
    $region7: #{tpu_custom_call.1} parent=1 // pred_check_branch
      %14 = sbr.rel (0) target = $region9
    $region8: #{tpu_custom_call.1} parent=1 // pred_region
      _
    $region9: #{tpu_custom_call.1} parent=1 // pred_fallthru
      _
    // Predicated region
    $region10: #{tpu_custom_call.1} parent=1 // pred_check
      _
    $region11: #{tpu_custom_call.1} parent=1 // pred_check_branch
      %16 = sbr.rel (0) target = $region13
    $region12: #{tpu_custom_call.1} parent=1 // pred_region
      _
    $region13: #{tpu_custom_call.1} parent=1 // pred_fallthru
      _
    // Predicated region
    $region14: #{tpu_custom_call.1} parent=1 // pred_check
      _
    $region15: #{tpu_custom_call.1} parent=1 // pred_check_branch
      %18 = sbr.rel (0) target = $region17
    $region16: #{tpu_custom_call.1} parent=1 // pred_region
      _
    $region17: #{tpu_custom_call.1} parent=1 // pred_fallthru
      _
    // Predicated region
    $region18: #{tpu_custom_call.1} parent=1 // pred_check
      _
    $region19: #{tpu_custom_call.1} parent=1 // pred_check_branch
      %20 = sbr.rel (0) target = $region21
    $region20: #{tpu_custom_call.1} parent=1 // pred_region
      _
    $region21: #{tpu_custom_call.1} parent=1 // pred_fallthru
      _
    %v21 = vld [vmem:[%s0] sm:$0xff]
    %v22 = vld [vmem:[%s1] sm:$0xf]
    %v23 = vld [vmem:[%s2] sm:$0x1]
    %v25 = vperm.slane %v23, 0
    %vm27 = vcmask 31744
    %v29 = vsel %vm27, %v21, 0
    %vm31 = vcmask 1043456
    %v33 = vsel %vm31, %v22, 0
    %35 = vmatpush.msra.mxu0 0.0
    %36 = vmatpush.msra.mxu0 0.0
    %37 = vmatpush.msra.mxu0 0.0
    %38 = vmatpush.msra.mxu0 0.0
    %39 = vmatpush.msra.mxu0 0.0
    %40 = vmatpush.msra.mxu0 0.0
    %41 = vmatpush.msra.mxu0 0.0
    %42 = vmatpush.msra.mxu0 0.0
    %43 = vmatpush.msra.mxu0 0.0
    %44 = vmatpush.msra.mxu0 0.0
    %45 = vmatpush.msra.mxu0 0.0
    %46 = vmatpush.msra.mxu0 0.0
    %47 = vmatpush.msra.mxu0 0.0
    %48 = vmatpush.msra.mxu0 0.0
    %49 = vmatpush.msra.mxu0 0.0
    %50 = vmatpush.msra.mxu0 %v33
    %51 = vmatmul.f32.gmra.mxu0 %v29
    %v52 = vpop.f32.mrf.mxu0
    %v53 = vadd.f32 %v25, %v52
    %54 = vdwg.mxu0
    %v55 = vmax.f32 %v53, 0.0
    %v56 = vld [vmem:[%s3] sm:$0xff]
    %v57 = vld [vmem:[%s3 + $0x8] sm:$0xff]
    %v58 = vld [vmem:[%s3 + $0x10] sm:$0xff]
    %v59 = vld [vmem:[%s3 + $0x18] sm:$0xff]
    %v60 = vld [vmem:[%s3 + $0x20] sm:$0xff]
    %v61 = vld [vmem:[%s3 + $0x28] sm:$0xff]
    %v62 = vld [vmem:[%s3 + $0x30] sm:$0xff]
    %v63 = vld [vmem:[%s3 + $0x38] sm:$0xff]
    %v64 = vld [vmem:[%s3 + $0x40] sm:$0xff]
    %v65 = vld [vmem:[%s3 + $0x48] sm:$0xff]
    %v66 = vld [vmem:[%s3 + $0x50] sm:$0xff]
    %v67 = vld [vmem:[%s3 + $0x58] sm:$0xff]
    %v68 = vld [vmem:[%s3 + $0x60] sm:$0xff]
    %v69 = vld [vmem:[%s3 + $0x68] sm:$0xff]
    %v70 = vld [vmem:[%s3 + $0x70] sm:$0xff]
    %v71 = vld [vmem:[%s3 + $0x78] sm:$0xff]
    %v72 = vld [vmem:[%s4] sm:$0x1]
    %v74 = vperm.slane %v72, 0
    %76 = vmatpush.msra.mxu0 %v71
    %77 = vmatpush.msra.mxu0 %v70
    %78 = vmatpush.msra.mxu0 %v69
    %79 = vmatpush.msra.mxu0 %v68
    %80 = vmatpush.msra.mxu0 %v67
    %81 = vmatpush.msra.mxu0 %v66
    %82 = vmatpush.msra.mxu0 %v65
    %83 = vmatpush.msra.mxu0 %v64
    %84 = vmatpush.msra.mxu0 %v63
    %85 = vmatpush.msra.mxu0 %v62
    %86 = vmatpush.msra.mxu0 %v61
    %87 = vmatpush.msra.mxu0 %v60
    %88 = vmatpush.msra.mxu0 %v59
    %89 = vmatpush.msra.mxu0 %v58
    %90 = vmatpush.msra.mxu0 %v57
    %91 = vmatpush.msra.mxu0 %v56
    %92 = vmatmul.f32.gmra.mxu0 %v55
    %v93 = vpop.f32.mrf.mxu0
    %v94 = vadd.f32 %v74, %v93
    %95 = vdwg.mxu0
    %vm96 = vcmask 23552
    %97 = vst.msk [vmem:[#allocation2] sm:$0xff] %vm96, %v94
    // Predicated region
    $region22: #{tpu_custom_call.1} parent=1 // pred_check
      _
    $region23: #{tpu_custom_call.1} parent=1 // pred_check_branch
      %99 = sbr.rel (0) target = $region25
    $region24: #{tpu_custom_call.1} parent=1 // pred_region
      %101 = vsyncadd [#allocation3], 96
      %s102 = sshll.u32 [#allocation2], 4
      %s103 = int_to_ptr.vmem [resolvable:$true] %s102
      %s104 = sshll.u32 %s5, 4
      %s105 = int_to_ptr.hbm [resolvable:$true] %s104
      %110 = dma.vmem_to_hbm [thread:$0]  %s103, 32, %s105, [#allocation3], 32, 32, 2
    $region25: #{tpu_custom_call.1} parent=1 // pred_fallthru
      _
    // Predicated region
    $region26: #{tpu_custom_call.1} parent=1 // pred_check
      _
    $region27: #{tpu_custom_call.1} parent=1 // pred_check_branch
      %112 = sbr.rel (0) target = $region29
    $region28: #{tpu_custom_call.1} parent=1 // pred_region
      %114 = dma.done [#allocation3], 128
    $region29: #{tpu_custom_call.1} parent=1 // pred_fallthru
      _
    %115 = vsyncpa [#allocation3], 1

</llo_original>
